<compile_context>
chip_gen: v7x
topology: tpu7x:2x2x1
jax: 0.10.0
libtpu: 0.0.40
codegen_flags: <defaults>
</compile_context>

<pallas_src>
import functools

import jax
import jax.numpy as jnp
import numpy as np
from jax import lax
from jax.experimental import pallas as pl
from jax.experimental.pallas import tpu as pltpu


def _round_up(v, m):
    return ((v + m - 1) // m) * m


def _length_regulator_kernel(band_ref, sd_ref, x_ref, out_ref, acc_ref, *, mm_precision):
    # band_ref: (B * n_mt * 2,) int32 in SMEM (scalar prefetch): [blk_lo, blk_hi] per (b, m-tile)
    # sd_ref  : (1, 2, tile_t) int32 — row 0 = start (exclusive cumsum), row 1 = duration
    # x_ref   : (1, tile_t, Hp)
    # out_ref : (1, tile_m, Hp)
    # acc_ref : (tile_m, Hp) float32 scratch (resident across the k axis)
    b = pl.program_id(0)
    m = pl.program_id(1)
    k = pl.program_id(2)
    n_mt = pl.num_programs(1)
    n_k = pl.num_programs(2)
    tile_m = out_ref.shape[1]
    tile_t = x_ref.shape[1]

    base = (b * n_mt + m) * 2
    blk_lo = band_ref[base]
    blk_hi = band_ref[base + 1]

    @pl.when(k == 0)
    def _():
        acc_ref[...] = jnp.zeros_like(acc_ref)

    # Only token blocks inside the band contribute; empty tiles have blk_hi < blk_lo,
    # so fully-padded output tiles do no MXU / VPU work at all.
    @pl.when(jnp.logical_and(k >= blk_lo, k <= blk_hi))
    def _():
        frame0 = m * tile_m
        start = sd_ref[0, 0:1, :]                          # (1, tile_t) int32
        dur = sd_ref[0, 1:2, :]                            # (1, tile_t) int32
        # Unsigned trick: gate = 1 iff 0 <= frame - start < dur  (negative wraps huge).
        rel = (frame0 - start) + lax.broadcasted_iota(jnp.int32, (tile_m, tile_t), 0)
        gate = (rel.astype(jnp.uint32) < dur.astype(jnp.uint32)).astype(x_ref.dtype)
        acc_ref[...] += jnp.dot(gate, x_ref[0],
                                preferred_element_type=jnp.float32,
                                precision=mm_precision)

    @pl.when(k == n_k - 1)
    def _():
        out_ref[0] = acc_ref[...].astype(out_ref.dtype)


def length_regulator(x, duration, max_len=None, *, tile_m=256, tile_t=256):
    """JAX/Pallas equivalent of LengthRegulator.forward(x, duration, max_len).

    Notes:
      * if max_len < sum(duration) for some batch, frames past max_len are truncated
        (the returned mel_len is the un-clamped expanded length, like the PyTorch module).
      * on v5e prefer tile_m=128 (4x128x128 MXU, 16 MiB default scoped VMEM).
    """
    B, T, H = x.shape
    dur = jnp.maximum(duration.astype(jnp.int32), 0)        # clamp like max(size, 0)
    cum = jnp.cumsum(dur, axis=-1)                          # inclusive prefix sum
    start = cum - dur                                       # exclusive prefix sum
    mel_len = cum[:, -1]                                    # (B,) int32

    if max_len is None:
        # TODO(synk): dynamic max_len forces a device->host sync and breaks under jit;
        # pass a static (bucketed, multiple-of-tile_m) max_len in production.
        max_len = int(jax.device_get(jnp.max(mel_len)))
    M = int(max_len)

    # Lane-dense hidden dim; pad only when needed (extra HBM pass otherwise avoided).
    Hp = _round_up(H, 128)
    if Hp != H:
        x = jnp.pad(x, ((0, 0), (0, 0), (0, Hp - H)))

    # Output-time tiling (multiple of 8 sublanes).
    tile_m = max(8, min(tile_m, _round_up(M, 8)))
    Mp = _round_up(M, tile_m)
    n_mt = Mp // tile_m

    # Token (contraction) tiling: one block for small T, else 128-aligned blocks.
    if T <= tile_t:
        tile_t, Tp = T, T
    else:
        tile_t = _round_up(tile_t, 128)
        Tp = _round_up(T, tile_t)
    n_kt = Tp // tile_t

    sd = jnp.stack([start, dur], axis=1)                    # (B, 2, T) int32
    if Tp != T:
        x = jnp.pad(x, ((0, 0), (0, Tp - T), (0, 0)))
        sd = jnp.pad(sd, ((0, 0), (0, 0), (0, Tp - T)))     # padded dur == 0 -> zero gate

    # Per-(batch, m-tile) band of token blocks [blk_lo, blk_hi] (inclusive); tiles that
    # lie entirely past sum(duration) get (0, -1) so the kernel writes pure zeros.
    f_lo = jnp.arange(n_mt, dtype=jnp.int32) * tile_m                      # (n_mt,)
    f_hi = jnp.minimum(f_lo[None, :] + tile_m, mel_len[:, None]) - 1       # (B, n_mt)
    sorted_search = jax.vmap(lambda c, f: jnp.searchsorted(c, f, side="right"))
    tok_lo = sorted_search(cum, jnp.broadcast_to(f_lo, (B, n_mt)))
    tok_hi = sorted_search(cum, f_hi)
    blk_lo = (tok_lo // tile_t).astype(jnp.int32)
    blk_hi = (jnp.minimum(tok_hi, T - 1) // tile_t).astype(jnp.int32)
    empty = f_lo[None, :] >= mel_len[:, None]
    blk_lo = jnp.where(empty, 0, blk_lo)
    blk_hi = jnp.where(empty, -1, blk_hi)
    band = jnp.stack([blk_lo, blk_hi], axis=-1).reshape(-1).astype(jnp.int32)  # flat SMEM

    # f32 inputs: MXU is bf16-native; HIGHEST keeps the gather f32-accurate.
    mm_precision = (lax.Precision.HIGHEST if x.dtype == jnp.float32
                    else lax.Precision.DEFAULT)

    # Explicit VMEM budget (double-buffered blocks + scratch + gate temporaries).
    isz = jnp.dtype(x.dtype).itemsize
    budget = (2 * tile_t * Hp * isz          # x block (double-buffered)
              + 2 * tile_m * Hp * isz        # out block (double-buffered)
              + tile_m * Hp * 4              # f32 accumulator scratch
              + 4 * tile_m * tile_t * 4      # gate-build temporaries
              + 4 * 2 * tile_t * 4)          # start/dur blocks
    vmem_limit = int(min(max(4 * budget, 16 << 20), 32 << 20))

    def _band_block(k, lo, hi):
        # Clamp into the band so out-of-band grid steps revisit the same block (no DMA).
        return jnp.minimum(jnp.maximum(k, lo), jnp.maximum(hi, lo))

    def _sd_index_map(b, m, k, band_ref):
        base = (b * n_mt + m) * 2
        return (b, 0, _band_block(k, band_ref[base], band_ref[base + 1]))

    def _x_index_map(b, m, k, band_ref):
        base = (b * n_mt + m) * 2
        return (b, _band_block(k, band_ref[base], band_ref[base + 1]), 0)

    kernel = functools.partial(_length_regulator_kernel, mm_precision=mm_precision)

    out = pl.pallas_call(
        kernel,
        out_shape=jax.ShapeDtypeStruct((B, Mp, Hp), x.dtype),
        grid_spec=pltpu.PrefetchScalarGridSpec(
            num_scalar_prefetch=1,
            grid=(B, n_mt, n_kt),                    # B outermost: megacore shards batch
            in_specs=[
                pl.BlockSpec((1, 2, tile_t), _sd_index_map),     # start / dur band block
                pl.BlockSpec((1, tile_t, Hp), _x_index_map),     # x band block
            ],
            out_specs=pl.BlockSpec((1, tile_m, Hp), lambda b, m, k, band: (b, m, 0)),
            scratch_shapes=[pltpu.VMEM((tile_m, Hp), jnp.float32)],
        ),
        compiler_params=pltpu.CompilerParams(
            dimension_semantics=("parallel", "parallel", "arbitrary"),
            vmem_limit_bytes=vmem_limit,
        ),
    )(band, sd, x)

    if Mp != M or Hp != H:
        out = out[:, :M, :H]
    return out, mel_len


if __name__ == "__main__":
    key = jax.random.PRNGKey(0)
    kx, kd = jax.random.split(key)

    B, T, H = 2, 8, 32
    max_len = 32  # >= max possible sum of durations (8 * 3)

    x = jax.random.normal(kx, (B, T, H), dtype=jnp.float32)
    duration = jax.random.randint(kd, (B, T), 0, 4, dtype=jnp.int32)

    out, mel_len = length_regulator(x, duration, max_len)
    out = jax.block_until_ready(out)
    mel_len = jax.block_until_ready(mel_len)

    # Reference (mirrors the PyTorch loop: expand each token, cat, zero-pad to max_len).
    xn = np.asarray(x)
    dn = np.asarray(duration)
    ref = np.zeros((B, max_len, H), np.float32)
    ref_len = np.zeros((B,), np.int32)
    for b in range(B):
        rows = []
        for t in range(T):
            r = max(int(dn[b, t]), 0)
            rows.extend([xn[b, t]] * r)
        L = len(rows)
        ref_len[b] = L
        if L:
            ref[b, :L] = np.stack(rows, 0)

    assert out.shape == (B, max_len, H)
    assert np.allclose(np.asarray(out), ref)
    assert np.array_equal(np.asarray(mel_len), ref_len)
    print("KERNEL_OK")
</pallas_src>

<mosaic_0001>
module attributes {stable_mosaic.version = 11 : i64} {
  func.func @_length_regulator_kernel(%arg0: i32, %arg1: i32, %arg2: i32, %arg3: memref<4xi32, #tpu.memory_space<smem>>, %arg4: memref<1x2x8xi32, #tpu.memory_space<vmem>>, %arg5: memref<1x8x128xf32, #tpu.memory_space<vmem>>, %arg6: memref<1x32x128xf32, #tpu.memory_space<vmem>>, %arg7: memref<32x128xf32, #tpu.memory_space<vmem>>) attributes {dimension_semantics = [#tpu.dimension_semantics<parallel>, #tpu.dimension_semantics<parallel>, #tpu.dimension_semantics<arbitrary>], iteration_bounds = array<i64: 2, 1, 1>, scalar_prefetch = 1 : i64, scratch_operands = 1 : i64, tpu.core_type = #tpu.core_type<tc>, window_params = [{transform_indices = @transform_0, window_bounds = array<i64: 1, 2, 8>}, {transform_indices = @transform_1, window_bounds = array<i64: 1, 8, 128>}, {transform_indices = @transform_2, window_bounds = array<i64: 1, 32, 128>}]} {
    %c1_i32 = arith.constant 1 : i32
    %0 = arith.muli %arg0, %c1_i32 : i32
    %1 = arith.addi %0, %arg1 : i32
    %c2_i32 = arith.constant 2 : i32
    %2 = arith.muli %1, %c2_i32 : i32
    %3 = arith.index_cast %2 : i32 to index
    %4 = memref.load %arg3[%3] : memref<4xi32, #tpu.memory_space<smem>>
    %c1_i32_0 = arith.constant 1 : i32
    %5 = arith.addi %2, %c1_i32_0 : i32
    %6 = arith.index_cast %5 : i32 to index
    %7 = memref.load %arg3[%6] : memref<4xi32, #tpu.memory_space<smem>>
    %c0_i32 = arith.constant 0 : i32
    %8 = arith.cmpi eq, %arg2, %c0_i32 : i32
    %9 = arith.extui %8 : i1 to i32
    %c0_i32_1 = arith.constant 0 : i32
    %10 = arith.cmpi ne, %9, %c0_i32_1 : i32
    scf.if %10 {
      %cst = arith.constant 0.000000e+00 : f32
      %19 = vector.broadcast %cst : f32 to vector<32x128xf32>
      %c0 = arith.constant 0 : index
      %c0_5 = arith.constant 0 : index
      %20 = vector.load %arg7[%c0, %c0_5] : memref<32x128xf32, #tpu.memory_space<vmem>>, vector<32x128xf32>
      tpu.vector_store %arg7[%c0, %c0_5], %19 {strides = array<i32>} : memref<32x128xf32, #tpu.memory_space<vmem>>, vector<32x128xf32>,
    } else {
    }
    %11 = arith.cmpi sge, %arg2, %4 : i32
    %12 = arith.cmpi sle, %arg2, %7 : i32
    %13 = arith.andi %11, %12 : i1
    %14 = arith.extui %13 : i1 to i32
    %c0_i32_2 = arith.constant 0 : i32
    %15 = arith.cmpi ne, %14, %c0_i32_2 : i32
    scf.if %15 {
      %c32_i32 = arith.constant 32 : i32
      %19 = arith.muli %arg1, %c32_i32 : i32
      %c0 = arith.constant 0 : index
      %c0_5 = arith.constant 0 : index
      %c0_6 = arith.constant 0 : index
      %20 = vector.load %arg4[%c0, %c0_5, %c0_6] : memref<1x2x8xi32, #tpu.memory_space<vmem>>, vector<1x1x8xi32>
      %21 = vector.shape_cast %20 : vector<1x1x8xi32> to vector<1x8xi32>
      %c0_7 = arith.constant 0 : index
      %c1 = arith.constant 1 : index
      %c0_8 = arith.constant 0 : index
      %22 = vector.load %arg4[%c0_7, %c1, %c0_8] : memref<1x2x8xi32, #tpu.memory_space<vmem>>, vector<1x1x8xi32>
      %23 = vector.shape_cast %22 : vector<1x1x8xi32> to vector<1x8xi32>
      %24 = vector.broadcast %19 : i32 to vector<1x8xi32>
      %25 = arith.subi %24, %21 : vector<1x8xi32>
      %26 = tpu.iota {dimensions = array<i32: 0>} : vector<32x8xi32>
      %27 = vector.broadcast %25 : vector<1x8xi32> to vector<32x8xi32>
      %28 = arith.addi %27, %26 : vector<32x8xi32>
      %29 = vector.broadcast %23 : vector<1x8xi32> to vector<32x8xi32>
      %30 = arith.cmpi ult, %28, %29 : vector<32x8xi32>
      %31 = arith.extui %30 : vector<32x8xi1> to vector<32x8xi32>
      %32 = arith.sitofp %31 : vector<32x8xi32> to vector<32x8xf32>
      %c0_9 = arith.constant 0 : index
      %c0_10 = arith.constant 0 : index
      %33 = vector.load %arg7[%c0_9, %c0_10] : memref<32x128xf32, #tpu.memory_space<vmem>>, vector<32x128xf32>
      %c0_11 = arith.constant 0 : index
      %c0_12 = arith.constant 0 : index
      %c0_13 = arith.constant 0 : index
      %34 = vector.load %arg5[%c0_11, %c0_12, %c0_13] : memref<1x8x128xf32, #tpu.memory_space<vmem>>, vector<1x8x128xf32>
      %35 = vector.shape_cast %34 : vector<1x8x128xf32> to vector<8x128xf32>
      %cst = arith.constant dense<0.000000e+00> : vector<32x128xf32>
      %36 = tpu.matmul %32, %35, %cst {dimension_numbers = #tpu.dot_dimension_numbers<[1], [0], [0], [1], [0, 0, 1, 1], [], []>, precision = #tpu.contract_precision<fp32>} : vector<32x8xf32>, vector<8x128xf32>, vector<32x128xf32> -> vector<32x128xf32>
      %37 = arith.addf %33, %36 : vector<32x128xf32>
      %c0_14 = arith.constant 0 : index
      %c0_15 = arith.constant 0 : index
      %38 = vector.load %arg7[%c0_14, %c0_15] : memref<32x128xf32, #tpu.memory_space<vmem>>, vector<32x128xf32>
      tpu.vector_store %arg7[%c0_14, %c0_15], %37 {strides = array<i32>} : memref<32x128xf32, #tpu.memory_space<vmem>>, vector<32x128xf32>,
    } else {
    }
    %c0_i32_3 = arith.constant 0 : i32
    %16 = arith.cmpi eq, %arg2, %c0_i32_3 : i32
    %17 = arith.extui %16 : i1 to i32
    %c0_i32_4 = arith.constant 0 : i32
    %18 = arith.cmpi ne, %17, %c0_i32_4 : i32
    scf.if %18 {
      %c0 = arith.constant 0 : index
      %c0_5 = arith.constant 0 : index
      %19 = vector.load %arg7[%c0, %c0_5] : memref<32x128xf32, #tpu.memory_space<vmem>>, vector<32x128xf32>
      %c0_6 = arith.constant 0 : index
      %c0_7 = arith.constant 0 : index
      %c0_8 = arith.constant 0 : index
      %20 = vector.load %arg6[%c0_6, %c0_7, %c0_8] : memref<1x32x128xf32, #tpu.memory_space<vmem>>, vector<1x32x128xf32>
      %21 = vector.shape_cast %20 : vector<1x32x128xf32> to vector<32x128xf32>
      %22 = vector.shape_cast %19 : vector<32x128xf32> to vector<1x32x128xf32>
      tpu.vector_store %arg6[%c0_6, %c0_7, %c0_8], %22 {strides = array<i32>} : memref<1x32x128xf32, #tpu.memory_space<vmem>>, vector<1x32x128xf32>,
    } else {
    }
    return
  }
  func.func @transform_0(%arg0: i32, %arg1: i32, %arg2: i32, %arg3: memref<4xi32, #tpu.memory_space<smem>>) -> (i32, i32, i32) {
    %c1_i32 = arith.constant 1 : i32
    %0 = arith.muli %arg0, %c1_i32 : i32
    %1 = arith.addi %0, %arg1 : i32
    %c2_i32 = arith.constant 2 : i32
    %2 = arith.muli %1, %c2_i32 : i32
    %3 = arith.index_cast %2 : i32 to index
    %4 = memref.load %arg3[%3] : memref<4xi32, #tpu.memory_space<smem>>
    %c1_i32_0 = arith.constant 1 : i32
    %5 = arith.addi %2, %c1_i32_0 : i32
    %6 = arith.index_cast %5 : i32 to index
    %7 = memref.load %arg3[%6] : memref<4xi32, #tpu.memory_space<smem>>
    %8 = arith.maxsi %arg2, %4 : i32
    %9 = arith.maxsi %7, %4 : i32
    %10 = arith.minsi %8, %9 : i32
    %c0_i32 = arith.constant 0 : i32
    %c0_i32_1 = arith.constant 0 : i32
    return %arg0, %c0_i32, %10 : i32, i32, i32
  }
  func.func @transform_1(%arg0: i32, %arg1: i32, %arg2: i32, %arg3: memref<4xi32, #tpu.memory_space<smem>>) -> (i32, i32, i32) {
    %c1_i32 = arith.constant 1 : i32
    %0 = arith.muli %arg0, %c1_i32 : i32
    %1 = arith.addi %0, %arg1 : i32
    %c2_i32 = arith.constant 2 : i32
    %2 = arith.muli %1, %c2_i32 : i32
    %3 = arith.index_cast %2 : i32 to index
    %4 = memref.load %arg3[%3] : memref<4xi32, #tpu.memory_space<smem>>
    %c1_i32_0 = arith.constant 1 : i32
    %5 = arith.addi %2, %c1_i32_0 : i32
    %6 = arith.index_cast %5 : i32 to index
    %7 = memref.load %arg3[%6] : memref<4xi32, #tpu.memory_space<smem>>
    %8 = arith.maxsi %arg2, %4 : i32
    %9 = arith.maxsi %7, %4 : i32
    %10 = arith.minsi %8, %9 : i32
    %c0_i32 = arith.constant 0 : i32
    %c0_i32_1 = arith.constant 0 : i32
    return %arg0, %10, %c0_i32 : i32, i32, i32
  }
  func.func @transform_2(%arg0: i32, %arg1: i32, %arg2: i32, %arg3: memref<4xi32, #tpu.memory_space<smem>>) -> (i32, i32, i32) {
    %c0_i32 = arith.constant 0 : i32
    %c0_i32_0 = arith.constant 0 : i32
    return %arg0, %arg1, %c0_i32 : i32, i32, i32
  }
}

</mosaic_0001>

<llo_original>
// kernel: tpu_custom_call.1
$region0: #{tpu_custom_call.1}
  #allocation0 [shape = 'u32[]', space=smem, size = 0x4, offset = 0x4, fixed_abs, tag = 'smem constant byte address 0x4 - core index']
  #allocation1 [shape = 'u32[144,128]{1,0:T(1,128)}', space=vmem, size = 0x12000, scoped, tag = 'internal scratch']
  #allocation2 [shape = 'f32[32,128]{1,0:T(8,128)}', space=vmem, size = 0x4000, scoped, tag = 'scratch operand']
  #allocation3 [shape = 's32[1]{0}', space=sflag, size = 0x4, scoped, tag = 'scoped memory for tpu_custom_call.1']
  #allocation4 [shape = 'u8[512]{0}', space=smem, size = 0x200, scoped, tag = 'prefetched SMEM operand 0']
  %s0 = inlined_call_operand.hbm [shape: s32[4], index: 0, kind: input, shape index: {}]
  %s1 = inlined_call_operand.hbm [shape: s32[2,2,8], index: 1, kind: input, shape index: {}]
  %s2 = inlined_call_operand.hbm [shape: f32[2,8,128], index: 2, kind: input, shape index: {}]
  %s3 = inlined_call_operand.hbm [shape: f32[2,32,128], index: 3, kind: output, shape index: {}]
  %s4 = sld [smem:[#allocation0]]
  $region61: #{tpu_custom_call.1} parent=0
    _
  %s6 = ssub.s32 1, %s4
  %s7 = scalar_select 0, %s6, %s4
  %9 = dma.hbm_to_smem %s0, 16, [#allocation4], [#allocation3]
  %10 = dma.done [#allocation3], 16
  %11 = sfence
  $region1: #{tpu_custom_call.1} parent=0
    #allocation5 [shape = 'u8[2048]{0}', space=vmem, size = 0x800, scoped, tag = 'input window, operand 1']
    #allocation6 [shape = 's32[2]{0}', space=sflag, size = 0x8, scoped, tag = 'scoped memory for tpu_custom_call.1']
    #allocation7 [shape = 's32[2]{0}', space=sflag, size = 0x8, scoped, tag = 'scoped memory for tpu_custom_call.1']
    #allocation8 [shape = 'u8[8192]{0}', space=vmem, size = 0x2000, scoped, tag = 'input window, operand 2']
    #allocation9 [shape = 's32[2]{0}', space=sflag, size = 0x8, scoped, tag = 'scoped memory for tpu_custom_call.1']
    #allocation10 [shape = 'u8[32768]{0}', space=vmem, size = 0x8000, scoped, tag = 'output window, operand 0']
    %12 = vsyncpa [#allocation6], 0
    %s13 = scalar_lea.sflag [#allocation6], 1
    %14 = vsyncpa %s13, 0
    %15 = vsyncpa [#allocation9], 0
    %s16 = scalar_lea.sflag [#allocation9], 1
    %17 = vsyncpa %s16, 0
    %18 = vsyncpa [#allocation7], 0
    %s19 = scalar_lea.sflag [#allocation7], 1
    %20 = vsyncpa %s19, 0
    loop: start=0, step=1, limit=4
    $region2: #{tpu_custom_call.1} parent=1 // loop_pre_header
      _
    $region3: #{tpu_custom_call.1} parent=1 // loop_header
      %s22 = sphi 0, %s26
      %p23 = scmp.ge.s32.totalorder %s22, 4
      %s29 = sphi 0, %s48
      %s30 = sphi 0, %s44
      %s31 = sphi 0, %s40
      %s32 = sphi 0, %s29
      %s33 = sphi 0, %s30
      %s34 = sphi 0, %s31
      %s35 = sphi 0, %s32
      %s36 = sphi 0, %s33
      %s37 = sphi 0, %s34
      %s75 = sphi 0, %s77
      %s78 = sphi 0, %s75
      %s79 = sphi 0, %s78
      %s95 = sphi 0, %s79
      %s125 = sphi 0, %s127
      %s128 = sphi 0, %s125
      %s129 = sphi 0, %s128
      %s145 = sphi 0, %s129
      %s153 = sphi 0, %s155
      %s156 = sphi 0, %s153
      %s157 = sphi 0, %s156
      %s173 = sphi 0, %s157
    $region4: #{tpu_custom_call.1} parent=1 // loop_header_branch
      %25 = sbr.rel (%p23) target = $region8
    $region5: #{tpu_custom_call.1} parent=1 // loop_body
      %s27 = ssub.s32 %s22, 1
      %s28 = ssub.s32 %s22, 2
      %s38 = sadd.s32 1, %s31
      %p39 = scmp.ge.s32.totalorder %s38, 1
      %s40 = scalar_select %p39, 0, %s38
      %s41 = sadd.s32 1, %s30
      %s42 = scalar_select %p39, %s41, %s30
      %p43 = scmp.ge.s32.totalorder %s42, 1
      %s44 = scalar_select %p43, 0, %s42
      %s45 = sadd.s32 1, %s29
      %s46 = scalar_select %p43, %s45, %s29
      %p47 = scmp.ge.s32.totalorder %s46, 2
      %s48 = scalar_select %p47, 0, %s46
      %s49 = sadd.s32 %s29, %s30
      %s50 = smul.u32 %s49, 2
      %s51 = sld [smem:[#allocation4 + %s50]]
      %s52 = sadd.s32 %s50, 1
      %s53 = sld [smem:[#allocation4 + %s52]]
      %p54 = scmp.gt.s32.totalorder %s31, %s51
      %s55 = scalar_select %p54, %s31, %s51
      %p56 = scmp.gt.s32.totalorder %s53, %s51
      %s57 = scalar_select %p56, %s53, %s51
      %p58 = scmp.lt.s32.totalorder %s55, %s57
      %s59 = scalar_select %p58, %s55, %s57
      %s60 = sadd.s32 %s48, %s44
      %s61 = smul.u32 %s60, 2
      %s62 = sld [smem:[#allocation4 + %s61]]
      %s63 = sadd.s32 %s61, 1
      %s64 = sld [smem:[#allocation4 + %s63]]
      %p65 = scmp.gt.s32.totalorder %s40, %s62
      %s66 = scalar_select %p65, %s40, %s62
      %p67 = scmp.gt.s32.totalorder %s64, %s62
      %s68 = scalar_select %p67, %s64, %s62
      %p69 = scmp.lt.s32.totalorder %s66, %s68
      %s70 = scalar_select %p69, %s66, %s68
      %s71 = ssub.s32 %s29, %s48
      %s72 = ssub.s32 %s59, %s70
      %s73 = sor.u32 %s71, %s72
      %p74 = scmp.eq.s32.totalorder %s73, 0
      %s76 = sadd.s32 %s75, 1
      %s77 = scalar_select %p74, %s75, %s76
      %p80 = pneg %p74
      %p81 = scmp.eq.s32.totalorder %s22, 1
      %p82 = por %p80, %p81
      %p83 = scmp.ne.s32.totalorder %s75, %s78
      %p84 = scmp.eq.s32.totalorder %s22, 0
      %p85 = por %p83, %p84
      %p86 = scmp.ne.s32.totalorder %s75, %s78
      %p87 = scmp.eq.s32.totalorder %s27, 1
      %p88 = por %p86, %p87
      %p89 = scmp.ne.s32.totalorder %s78, %s79
      %p90 = scmp.eq.s32.totalorder %s27, 0
      %p91 = por %p89, %p90
      %p92 = scmp.ne.s32.totalorder %s78, %s79
      %p93 = scmp.eq.s32.totalorder %s28, 1
      %p94 = por %p92, %p93
      %p96 = scmp.ne.s32.totalorder %s79, %s95
      %p97 = scmp.eq.s32.totalorder %s28, 0
      %p98 = por %p96, %p97
      %s99 = sadd.s32 %s29, %s30
      %s100 = smul.u32 %s99, 2
      %s101 = sld [smem:[#allocation4 + %s100]]
      %s102 = sadd.s32 %s100, 1
      %s103 = sld [smem:[#allocation4 + %s102]]
      %p104 = scmp.gt.s32.totalorder %s31, %s101
      %s105 = scalar_select %p104, %s31, %s101
      %p106 = scmp.gt.s32.totalorder %s103, %s101
      %s107 = scalar_select %p106, %s103, %s101
      %p108 = scmp.lt.s32.totalorder %s105, %s107
      %s109 = scalar_select %p108, %s105, %s107
      %s110 = sadd.s32 %s48, %s44
      %s111 = smul.u32 %s110, 2
      %s112 = sld [smem:[#allocation4 + %s111]]
      %s113 = sadd.s32 %s111, 1
      %s114 = sld [smem:[#allocation4 + %s113]]
      %p115 = scmp.gt.s32.totalorder %s40, %s112
      %s116 = scalar_select %p115, %s40, %s112
      %p117 = scmp.gt.s32.totalorder %s114, %s112
      %s118 = scalar_select %p117, %s114, %s112
      %p119 = scmp.lt.s32.totalorder %s116, %s118
      %s120 = scalar_select %p119, %s116, %s118
      %s121 = ssub.s32 %s29, %s48
      %s122 = ssub.s32 %s109, %s120
      %s123 = sor.u32 %s121, %s122
      %p124 = scmp.eq.s32.totalorder %s123, 0
      %s126 = sadd.s32 %s125, 1
      %s127 = scalar_select %p124, %s125, %s126
      %p130 = pneg %p124
      %p131 = scmp.eq.s32.totalorder %s22, 1
      %p132 = por %p130, %p131
      %p133 = scmp.ne.s32.totalorder %s125, %s128
      %p134 = scmp.eq.s32.totalorder %s22, 0
      %p135 = por %p133, %p134
      %p136 = scmp.ne.s32.totalorder %s125, %s128
      %p137 = scmp.eq.s32.totalorder %s27, 1
      %p138 = por %p136, %p137
      %p139 = scmp.ne.s32.totalorder %s128, %s129
      %p140 = scmp.eq.s32.totalorder %s27, 0
      %p141 = por %p139, %p140
      %p142 = scmp.ne.s32.totalorder %s128, %s129
      %p143 = scmp.eq.s32.totalorder %s28, 1
      %p144 = por %p142, %p143
      %p146 = scmp.ne.s32.totalorder %s129, %s145
      %p147 = scmp.eq.s32.totalorder %s28, 0
      %p148 = por %p146, %p147
      %s149 = ssub.s32 %s29, %s48
      %s150 = ssub.s32 %s30, %s44
      %s151 = sor.u32 %s149, %s150
      %p152 = scmp.eq.s32.totalorder %s151, 0
      %s154 = sadd.s32 %s153, 1
      %s155 = scalar_select %p152, %s153, %s154
      %p158 = pneg %p152
      %p159 = scmp.eq.s32.totalorder %s22, 1
      %p160 = por %p158, %p159
      %p161 = scmp.ne.s32.totalorder %s153, %s156
      %p162 = scmp.eq.s32.totalorder %s22, 0
      %p163 = por %p161, %p162
      %p164 = scmp.ne.s32.totalorder %s153, %s156
      %p165 = scmp.eq.s32.totalorder %s27, 1
      %p166 = por %p164, %p165
      %p167 = scmp.ne.s32.totalorder %s156, %s157
      %p168 = scmp.eq.s32.totalorder %s27, 0
      %p169 = por %p167, %p168
      %p170 = scmp.ne.s32.totalorder %s156, %s157
      %p171 = scmp.eq.s32.totalorder %s28, 1
      %p172 = por %p170, %p171
      %p174 = scmp.ne.s32.totalorder %s157, %s173
      %p175 = scmp.eq.s32.totalorder %s28, 0
      %p176 = por %p174, %p175
      %p177 = scmp.le.s32.totalorder 1, %s22
      %p178 = scmp.lt.s32.totalorder %s22, 3
      %p179 = pnand %p177, %p178
      %p180 = pneg %p179
      // Predicated region
      $region9: #{tpu_custom_call.1} parent=5 // pred_check
        _
      $region10: #{tpu_custom_call.1} parent=5 // pred_check_branch
        %182 = sbr.rel (%p179) target = $region12
      $region11: #{tpu_custom_call.1} parent=5 // pred_region
        %s183 = ssub.s32 %s22, 1
      $region12: #{tpu_custom_call.1} parent=5 // pred_fallthru
        _
      %p184 = scmp.lt.s32.totalorder %s22, 2
      // Predicated region
      $region13: #{tpu_custom_call.1} parent=5 // pred_check
        %p185 = pneg %p184
      $region14: #{tpu_custom_call.1} parent=5 // pred_check_branch
        %187 = sbr.rel (%p185) target = $region16
      $region15: #{tpu_custom_call.1} parent=5 // pred_region
        // Predicated region
        $region17: #{tpu_custom_call.1} parent=15 // pred_check
          %p188 = pneg %p85
        $region18: #{tpu_custom_call.1} parent=15 // pred_check_branch
          %190 = sbr.rel (%p188) target = $region20
        $region19: #{tpu_custom_call.1} parent=15 // pred_region
          %s191 = sand.u32 %s75, 1
          %s192 = scalar_lea.sflag [#allocation6], %s191
          %s193 = sand.u32 %s75, 1
          %s194 = smul.addr %s193, 2
          %s195 = scalar_lea.vmem [#allocation5], %s194
          %s196 = sadd.s32 %s29, %s30
          %s197 = smul.u32 %s196, 2
          %s198 = sld [smem:[#allocation4 + %s197]]
          %s199 = sadd.s32 %s197, 1
          %s200 = sld [smem:[#allocation4 + %s199]]
          %p201 = scmp.gt.s32.totalorder %s31, %s198
          %s202 = scalar_select %p201, %s31, %s198
          %p203 = scmp.gt.s32.totalorder %s200, %s198
          %s204 = scalar_select %p203, %s200, %s198
          %p205 = scmp.lt.s32.totalorder %s202, %s204
          %s206 = scalar_select %p205, %s202, %s204
          %s208 = ssub.s32 32, 32
          %209 = vsyncadd %s192, %s208
          %s210 = sadd.s32 %s206, %s29
          %s211 = smul.addr %s210, 32
          %s212 = scalar_lea.hbm %s1, %s211
          %s214 = sshll.u32 %s195, 4
          %s215 = int_to_ptr.vmem [resolvable:$true] %s214
          %217 = dma.hbm_to_vmem [thread:$0]  %s212, 32, %s215, %s192
        $region20: #{tpu_custom_call.1} parent=15 // pred_fallthru
          _
        // Predicated region
        $region21: #{tpu_custom_call.1} parent=15 // pred_check
          %p218 = pneg %p135
        $region22: #{tpu_custom_call.1} parent=15 // pred_check_branch
          %220 = sbr.rel (%p218) target = $region24
        $region23: #{tpu_custom_call.1} parent=15 // pred_region
          %s221 = sand.u32 %s125, 1
          %s222 = scalar_lea.sflag [#allocation9], %s221
          %s223 = sand.u32 %s125, 1
          %s224 = smul.addr %s223, 8
          %s225 = scalar_lea.vmem [#allocation8], %s224
          %s226 = sadd.s32 %s29, %s30
          %s227 = smul.u32 %s226, 2
          %s228 = sld [smem:[#allocation4 + %s227]]
          %s229 = sadd.s32 %s227, 1
          %s230 = sld [smem:[#allocation4 + %s229]]
          %p231 = scmp.gt.s32.totalorder %s31, %s228
          %s232 = scalar_select %p231, %s31, %s228
          %p233 = scmp.gt.s32.totalorder %s230, %s228
          %s234 = scalar_select %p233, %s230, %s228
          %p235 = scmp.lt.s32.totalorder %s232, %s234
          %s236 = scalar_select %p235, %s232, %s234
          %s238 = ssub.s32 128, 128
          %239 = vsyncadd %s222, %s238
          %s240 = sadd.s32 %s236, %s29
          %s241 = smul.addr %s240, 128
          %s242 = scalar_lea.hbm %s2, %s241
          %s244 = sshll.u32 %s225, 4
          %s245 = int_to_ptr.vmem [resolvable:$true] %s244
          %247 = dma.hbm_to_vmem [thread:$0]  %s242, 128, %s245, %s222
        $region24: #{tpu_custom_call.1} parent=15 // pred_fallthru
          _
      $region16: #{tpu_custom_call.1} parent=5 // pred_fallthru
        _
      %p248 = scmp.le.s32.totalorder 1, %s22
      %p249 = scmp.lt.s32.totalorder %s22, 3
      %p250 = pnand %p248, %p249
      %p251 = pneg %p250
      // Predicated region
      $region25: #{tpu_custom_call.1} parent=5 // pred_check
        _
      $region26: #{tpu_custom_call.1} parent=5 // pred_check_branch
        %253 = sbr.rel (%p250) target = $region28
      $region27: #{tpu_custom_call.1} parent=5 // pred_region
        %s254 = ssub.s32 %s22, 1
        %s255 = sand.u32 %s78, 1
        %s256 = scalar_lea.sflag [#allocation6], %s255
        %s257 = sand.u32 %s78, 1
        %s258 = smul.addr %s257, 2
        %s259 = scalar_lea.vmem [#allocation5], %s258
        // Predicated region
        $region29: #{tpu_custom_call.1} parent=27 // pred_check
          %p260 = pneg %p91
        $region30: #{tpu_custom_call.1} parent=27 // pred_check_branch
          %262 = sbr.rel (%p260) target = $region32
        $region31: #{tpu_custom_call.1} parent=27 // pred_region
          %263 = dma.done %s256, 32
        $region32: #{tpu_custom_call.1} parent=27 // pred_fallthru
          _
        %s264 = sand.u32 %s128, 1
        %s265 = scalar_lea.sflag [#allocation9], %s264
        %s266 = sand.u32 %s128, 1
        %s267 = smul.addr %s266, 8
        %s268 = scalar_lea.vmem [#allocation8], %s267
        // Predicated region
        $region33: #{tpu_custom_call.1} parent=27 // pred_check
          %p269 = pneg %p141
        $region34: #{tpu_custom_call.1} parent=27 // pred_check_branch
          %271 = sbr.rel (%p269) target = $region36
        $region35: #{tpu_custom_call.1} parent=27 // pred_region
          %272 = dma.done %s265, 128
        $region36: #{tpu_custom_call.1} parent=27 // pred_fallthru
          _
        %s273 = sand.u32 %s78, 1
        %s274 = scalar_lea.sflag [#allocation6], %s273
        %s275 = sand.u32 %s78, 1
        %s276 = smul.addr %s275, 2
        %s277 = scalar_lea.vmem [#allocation5], %s276
        %p278 = pneg %p91
        %p279 = pneg %p88
        %s280 = sand.u32 %s128, 1
        %s281 = scalar_lea.sflag [#allocation9], %s280
        %s282 = sand.u32 %s128, 1
        %s283 = smul.addr %s282, 8
        %s284 = scalar_lea.vmem [#allocation8], %s283
        %p285 = pneg %p141
        %p286 = pneg %p138
        %p287 = pneg %p169
        %p288 = pneg %p166
        %s289 = sand.u32 %s156, 1
        %s290 = scalar_lea.sflag [#allocation7], %s289
        %s291 = sand.u32 %s156, 1
        %s292 = smul.addr %s291, 32
        %s293 = scalar_lea.vmem [#allocation10], %s292
        %s294 = sadd.s32 %s32, %s33
        %s295 = smul.u32 %s294, 2
        %s296 = sld [smem:[#allocation4 + %s295]]
        %s297 = sadd.s32 %s295, 1
        %s298 = sld [smem:[#allocation4 + %s297]]
        %p299 = scmp.gt.s32.totalorder %s34, %s296
        %s300 = scalar_select %p299, %s34, %s296
        %p301 = scmp.gt.s32.totalorder %s298, %s296
        %s302 = scalar_select %p301, %s298, %s296
        %p303 = scmp.lt.s32.totalorder %s300, %s302
        %s304 = scalar_select %p303, %s300, %s302
        %s305 = sadd.s32 %s32, %s33
        %s306 = smul.u32 %s305, 2
        %s307 = sld [smem:[#allocation4 + %s306]]
        %s308 = sadd.s32 %s306, 1
        %s309 = sld [smem:[#allocation4 + %s308]]
        %p310 = scmp.gt.s32.totalorder %s34, %s307
        %s311 = scalar_select %p310, %s34, %s307
        %p312 = scmp.gt.s32.totalorder %s309, %s307
        %s313 = scalar_select %p312, %s309, %s307
        %p314 = scmp.lt.s32.totalorder %s311, %s313
        %s315 = scalar_select %p314, %s311, %s313
        %s316 = smul.u32 4, %s33
        %s317 = sadd.s32 %s32, %s33
        %s318 = smul.u32 %s317, 2
        %s319 = sld [smem:[#allocation4 + %s318]]
        %s320 = sadd.s32 %s318, 1
        %s321 = sld [smem:[#allocation4 + %s320]]
        %p322 = scmp.eq.s32.totalorder %s34, 0
        // Predicated region
        $region37: #{tpu_custom_call.1} parent=27 // pred_check
          %p323 = pneg %p322
        $region38: #{tpu_custom_call.1} parent=27 // pred_check_branch
          %325 = sbr.rel (%p323) target = $region40
        $region39: #{tpu_custom_call.1} parent=27 // pred_region
          %326 = vst [vmem:[#allocation2] sm:$0xff] 0.0
          %327 = vst [vmem:[#allocation2 + $0x8] sm:$0xff] 0.0
          %328 = vst [vmem:[#allocation2 + $0x10] sm:$0xff] 0.0
          %329 = vst [vmem:[#allocation2 + $0x18] sm:$0xff] 0.0
        $region40: #{tpu_custom_call.1} parent=27 // pred_fallthru
          _
        %p330 = scmp.ge.s32.totalorder %s34, %s319
        %p331 = scmp.le.s32.totalorder %s34, %s321
        %p332 = pnand %p330, %p331
        %p333 = pneg %p332
        // Predicated region
        $region41: #{tpu_custom_call.1} parent=27 // pred_check
          _
        $region42: #{tpu_custom_call.1} parent=27 // pred_check_branch
          %335 = sbr.rel (%p332) target = $region44
        $region43: #{tpu_custom_call.1} parent=27 // pred_region
          %s336 = smul.u32 %s33, 32
          %v337 = vld [vmem:[%s259] sm:$0x1]
          %v338 = vld [vmem:[%s259 + $0x1] sm:$0x1]
          %v339 = vstv %s336
          %v340 = vsub.s32 %v339, %v337
          %v341 = vlaneseq
          %v342 = vshrl.u32 %v341, 7
          %v343 = vadd.s32 %v342, 8
          %v344 = vadd.s32 %v342, 16
          %v345 = vadd.s32 %v342, 24
          %v346 = vlaneseq
          %v347 = vshrl.u32 %v346, 7
          %v348 = vsub.s32 0, %v347
          %v349 = vrot.slane %v340, %v348
          %v350 = vadd.s32 %v349, %v342
          %v351 = vadd.s32 %v349, %v343
          %v352 = vadd.s32 %v349, %v344
          %v353 = vadd.s32 %v349, %v345
          %v354 = vlaneseq
          %v355 = vshrl.u32 %v354, 7
          %v356 = vsub.s32 0, %v355
          %v357 = vrot.slane %v338, %v356
          %vm358 = vcmp.lt.u32.totalorder %v350, %v357
          %vm359 = vcmp.lt.u32.totalorder %v351, %v357
          %vm360 = vcmp.lt.u32.totalorder %v352, %v357
          %vm361 = vcmp.lt.u32.totalorder %v353, %v357
          %v362 = vsel %vm358, 1, 0
          %v363 = vsel %vm359, 1, 0
          %v364 = vsel %vm360, 1, 0
          %v365 = vsel %vm361, 1, 0
          %v366 = vcvt.s32.f32 %v362
          %v367 = vcvt.s32.f32 %v363
          %v368 = vcvt.s32.f32 %v364
          %v369 = vcvt.s32.f32 %v365
          %v370 = vld [vmem:[#allocation2] sm:$0xff]
          %v371 = vld [vmem:[#allocation2 + $0x8] sm:$0xff]
          %v372 = vld [vmem:[#allocation2 + $0x10] sm:$0xff]
          %v373 = vld [vmem:[#allocation2 + $0x18] sm:$0xff]
          %v374 = vld [vmem:[%s268] sm:$0xff]
          %vm375 = vcmask 64512
          %v377 = vsel %vm375, %v366, 0
          %v380 = vsel %vm375, %v367, 0
          %v383 = vsel %vm375, %v368, 0
          %v386 = vsel %vm375, %v369, 0
          %388 = vmatprep.subr.mxu0 0.0
          %v389 = vand.u32 %v374, 4294901760
          %390 = vmatpush1.msra.mxu0 %v389
          %391 = vmatprep.subr.mxu0 0.0
          %392 = vmatpush1.msra.mxu0 0.0
          %393 = vmatprep.subr.mxu0 0.0
          %394 = vmatpush1.msra.mxu0 0.0
          %395 = vmatprep.subr.mxu0 0.0
          %396 = vmatpush1.msra.mxu0 0.0
          %397 = vmatprep.subr.mxu0 0.0
          %398 = vmatpush1.msra.mxu0 0.0
          %399 = vmatprep.subr.mxu0 0.0
          %400 = vmatpush1.msra.mxu0 0.0
          %401 = vmatprep.subr.mxu0 0.0
          %402 = vmatpush1.msra.mxu0 0.0
          %403 = vmatprep.subr.mxu0 0.0
          %404 = vmatpush1.msra.mxu0 0.0
          %405 = vmatprep.subr.mxu0 0.0
          %406 = vmatpush1.msra.mxu0 0.0
          %407 = vmatprep.subr.mxu0 0.0
          %408 = vmatpush1.msra.mxu0 0.0
          %409 = vmatprep.subr.mxu0 0.0
          %410 = vmatpush1.msra.mxu0 0.0
          %411 = vmatprep.subr.mxu0 0.0
          %412 = vmatpush1.msra.mxu0 0.0
          %413 = vmatprep.subr.mxu0 0.0
          %414 = vmatpush1.msra.mxu0 0.0
          %415 = vmatprep.subr.mxu0 0.0
          %416 = vmatpush1.msra.mxu0 0.0
          %417 = vmatprep.subr.mxu0 0.0
          %418 = vmatpush1.msra.mxu0 0.0
          %419 = vmatprep.subr.mxu0 0.0
          %420 = vmatpush1.msra.mxu0 0.0
          %421 = vmatprep.subr.mxu0 0.0
          %422 = vmatpush1.msra.mxu0 0.0
          %423 = vmatprep.subr.mxu0 0.0
          %424 = vmatpush1.msra.mxu0 0.0
          %425 = vmatprep.subr.mxu0 0.0
          %426 = vmatpush1.msra.mxu0 0.0
          %427 = vmatprep.subr.mxu0 0.0
          %428 = vmatpush1.msra.mxu0 0.0
          %429 = vmatprep.subr.mxu0 0.0
          %430 = vmatpush1.msra.mxu0 0.0
          %431 = vmatprep.subr.mxu0 0.0
          %432 = vmatpush1.msra.mxu0 0.0
          %433 = vmatprep.subr.mxu0 0.0
          %434 = vmatpush1.msra.mxu0 0.0
          %435 = vmatprep.subr.mxu0 0.0
          %436 = vmatpush1.msra.mxu0 0.0
          %437 = vmatprep.subr.mxu0 0.0
          %438 = vmatpush1.msra.mxu0 0.0
          %439 = vmatprep.subr.mxu0 0.0
          %440 = vmatpush1.msra.mxu0 0.0
          %441 = vmatprep.subr.mxu0 0.0
          %442 = vmatpush1.msra.mxu0 0.0
          %443 = vmatprep.subr.mxu0 0.0
          %444 = vmatpush1.msra.mxu0 0.0
          %445 = vmatprep.subr.mxu0 0.0
          %446 = vmatpush1.msra.mxu0 0.0
          %447 = vmatprep.subr.mxu0 0.0
          %448 = vmatpush1.msra.mxu0 0.0
          %449 = vmatprep.subr.mxu0 0.0
          %450 = vmatpush1.msra.mxu0 0.0
          %451 = vmatprep.subr.mxu0 0.0
          %452 = vmatpush1.msra.mxu0 0.0
          %453 = vmatprep.mubr.f32.mxu0 0.0
          %v454 = vand.u32 %v377, 4294901760
          %v455 = vsub.f32 %v377, %v454
          %v456 = vand.u32 %v455, 4294901760
          %v457 = vsub.f32 %v455, %v456
          %v458 = vand.u32 %v457, 4294901760
          %459 = vmatmul.mubr.f32.gmra.mrb[0].mxu0 %v458
          %v460 = vpop.f32.mrb[0].mxu0
          %v461 = vadd.f32 0.0, %v460
          %v462 = vpop.f32.mrb[0].mxu0
          %463 = vmatprep.mubr.f32.mxu0 0.0
          %v464 = vand.u32 %v380, 4294901760
          %v465 = vsub.f32 %v380, %v464
          %v466 = vand.u32 %v465, 4294901760
          %v467 = vsub.f32 %v465, %v466
          %v468 = vand.u32 %v467, 4294901760
          %469 = vmatmul.mubr.f32.gmra.mrb[0].mxu0 %v468
          %v470 = vpop.f32.mrb[0].mxu0
          %v471 = vadd.f32 0.0, %v470
          %v472 = vpop.f32.mrb[0].mxu0
          %473 = vmatprep.mubr.f32.mxu0 0.0
          %v474 = vand.u32 %v383, 4294901760
          %v475 = vsub.f32 %v383, %v474
          %v476 = vand.u32 %v475, 4294901760
          %v477 = vsub.f32 %v475, %v476
          %v478 = vand.u32 %v477, 4294901760
          %479 = vmatmul.mubr.f32.gmra.mrb[0].mxu0 %v478
          %v480 = vpop.f32.mrb[0].mxu0
          %v481 = vadd.f32 0.0, %v480
          %v482 = vpop.f32.mrb[0].mxu0
          %483 = vmatprep.mubr.f32.mxu0 0.0
          %v484 = vand.u32 %v386, 4294901760
          %v485 = vsub.f32 %v386, %v484
          %v486 = vand.u32 %v485, 4294901760
          %v487 = vsub.f32 %v485, %v486
          %v488 = vand.u32 %v487, 4294901760
          %489 = vmatmul.mubr.f32.gmra.mrb[0].mxu0 %v488
          %v490 = vpop.f32.mrb[0].mxu0
          %v491 = vadd.f32 0.0, %v490
          %v492 = vpop.f32.mrb[0].mxu0
          %493 = vdwg.mxu0
          %494 = vmatprep.subr.mxu0 0.0
          %v495 = vand.u32 %v374, 4294901760
          %v496 = vsub.f32 %v374, %v495
          %v497 = vand.u32 %v496, 4294901760
          %v498 = vsub.f32 %v496, %v497
          %v499 = vand.u32 %v498, 4294901760
          %500 = vmatpush1.msra.mxu0 %v499
          %501 = vmatprep.subr.mxu0 0.0
          %502 = vmatpush1.msra.mxu0 0.0
          %503 = vmatprep.subr.mxu0 0.0
          %504 = vmatpush1.msra.mxu0 0.0
          %505 = vmatprep.subr.mxu0 0.0
          %506 = vmatpush1.msra.mxu0 0.0
          %507 = vmatprep.subr.mxu0 0.0
          %508 = vmatpush1.msra.mxu0 0.0
          %509 = vmatprep.subr.mxu0 0.0
          %510 = vmatpush1.msra.mxu0 0.0
          %511 = vmatprep.subr.mxu0 0.0
          %512 = vmatpush1.msra.mxu0 0.0
          %513 = vmatprep.subr.mxu0 0.0
          %514 = vmatpush1.msra.mxu0 0.0
          %515 = vmatprep.subr.mxu0 0.0
          %516 = vmatpush1.msra.mxu0 0.0
          %517 = vmatprep.subr.mxu0 0.0
          %518 = vmatpush1.msra.mxu0 0.0
          %519 = vmatprep.subr.mxu0 0.0
          %520 = vmatpush1.msra.mxu0 0.0
          %521 = vmatprep.subr.mxu0 0.0
          %522 = vmatpush1.msra.mxu0 0.0
          %523 = vmatprep.subr.mxu0 0.0
          %524 = vmatpush1.msra.mxu0 0.0
          %525 = vmatprep.subr.mxu0 0.0
          %526 = vmatpush1.msra.mxu0 0.0
          %527 = vmatprep.subr.mxu0 0.0
          %528 = vmatpush1.msra.mxu0 0.0
          %529 = vmatprep.subr.mxu0 0.0
          %530 = vmatpush1.msra.mxu0 0.0
          %531 = vmatprep.subr.mxu0 0.0
          %532 = vmatpush1.msra.mxu0 0.0
          %533 = vmatprep.subr.mxu0 0.0
          %534 = vmatpush1.msra.mxu0 0.0
          %535 = vmatprep.subr.mxu0 0.0
          %536 = vmatpush1.msra.mxu0 0.0
          %537 = vmatprep.subr.mxu0 0.0
          %538 = vmatpush1.msra.mxu0 0.0
          %539 = vmatprep.subr.mxu0 0.0
          %540 = vmatpush1.msra.mxu0 0.0
          %541 = vmatprep.subr.mxu0 0.0
          %542 = vmatpush1.msra.mxu0 0.0
          %543 = vmatprep.subr.mxu0 0.0
          %544 = vmatpush1.msra.mxu0 0.0
          %545 = vmatprep.subr.mxu0 0.0
          %546 = vmatpush1.msra.mxu0 0.0
          %547 = vmatprep.subr.mxu0 0.0
          %548 = vmatpush1.msra.mxu0 0.0
          %549 = vmatprep.subr.mxu0 0.0
          %550 = vmatpush1.msra.mxu0 0.0
          %551 = vmatprep.subr.mxu0 0.0
          %552 = vmatpush1.msra.mxu0 0.0
          %553 = vmatprep.subr.mxu0 0.0
          %554 = vmatpush1.msra.mxu0 0.0
          %555 = vmatprep.subr.mxu0 0.0
          %556 = vmatpush1.msra.mxu0 0.0
          %557 = vmatprep.subr.mxu0 0.0
          %558 = vmatpush1.msra.mxu0 0.0
          %559 = vmatprep.subr.mxu0 0.0
          %560 = vmatpush1.msra.mxu0 0.0
          %561 = vmatprep.subr.mxu0 0.0
          %562 = vmatpush1.msra.mxu0 0.0
          %563 = vmatprep.mubr.f32.mxu0 0.0
          %v564 = vand.u32 %v377, 4294901760
          %565 = vmatmul.mubr.f32.gmra.mrb[0].mxu0 %v564
          %v566 = vpop.f32.mrb[0].mxu0
          %v567 = vadd.f32 %v461, %v566
          %v568 = vpop.f32.mrb[0].mxu0
          %569 = vmatprep.mubr.f32.mxu0 0.0
          %v570 = vand.u32 %v380, 4294901760
          %571 = vmatmul.mubr.f32.gmra.mrb[0].mxu0 %v570
          %v572 = vpop.f32.mrb[0].mxu0
          %v573 = vadd.f32 %v471, %v572
          %v574 = vpop.f32.mrb[0].mxu0
          %575 = vmatprep.mubr.f32.mxu0 0.0
          %v576 = vand.u32 %v383, 4294901760
          %577 = vmatmul.mubr.f32.gmra.mrb[0].mxu0 %v576
          %v578 = vpop.f32.mrb[0].mxu0
          %v579 = vadd.f32 %v481, %v578
          %v580 = vpop.f32.mrb[0].mxu0
          %581 = vmatprep.mubr.f32.mxu0 0.0
          %v582 = vand.u32 %v386, 4294901760
          %583 = vmatmul.mubr.f32.gmra.mrb[0].mxu0 %v582
          %v584 = vpop.f32.mrb[0].mxu0
          %v585 = vadd.f32 %v491, %v584
          %v586 = vpop.f32.mrb[0].mxu0
          %587 = vdwg.mxu0
          %588 = vmatprep.subr.mxu0 0.0
          %v589 = vand.u32 %v374, 4294901760
          %v590 = vsub.f32 %v374, %v589
          %591 = vmatpush1.msra.mxu0 %v590
          %592 = vmatprep.subr.mxu0 0.0
          %593 = vmatpush1.msra.mxu0 0.0
          %594 = vmatprep.subr.mxu0 0.0
          %595 = vmatpush1.msra.mxu0 0.0
          %596 = vmatprep.subr.mxu0 0.0
          %597 = vmatpush1.msra.mxu0 0.0
          %598 = vmatprep.subr.mxu0 0.0
          %599 = vmatpush1.msra.mxu0 0.0
          %600 = vmatprep.subr.mxu0 0.0
          %601 = vmatpush1.msra.mxu0 0.0
          %602 = vmatprep.subr.mxu0 0.0
          %603 = vmatpush1.msra.mxu0 0.0
          %604 = vmatprep.subr.mxu0 0.0
          %605 = vmatpush1.msra.mxu0 0.0
          %606 = vmatprep.subr.mxu0 0.0
          %607 = vmatpush1.msra.mxu0 0.0
          %608 = vmatprep.subr.mxu0 0.0
          %609 = vmatpush1.msra.mxu0 0.0
          %610 = vmatprep.subr.mxu0 0.0
          %611 = vmatpush1.msra.mxu0 0.0
          %612 = vmatprep.subr.mxu0 0.0
          %613 = vmatpush1.msra.mxu0 0.0
          %614 = vmatprep.subr.mxu0 0.0
          %615 = vmatpush1.msra.mxu0 0.0
          %616 = vmatprep.subr.mxu0 0.0
          %617 = vmatpush1.msra.mxu0 0.0
          %618 = vmatprep.subr.mxu0 0.0
          %619 = vmatpush1.msra.mxu0 0.0
          %620 = vmatprep.subr.mxu0 0.0
          %621 = vmatpush1.msra.mxu0 0.0
          %622 = vmatprep.subr.mxu0 0.0
          %623 = vmatpush1.msra.mxu0 0.0
          %624 = vmatprep.subr.mxu0 0.0
          %625 = vmatpush1.msra.mxu0 0.0
          %626 = vmatprep.subr.mxu0 0.0
          %627 = vmatpush1.msra.mxu0 0.0
          %628 = vmatprep.subr.mxu0 0.0
          %629 = vmatpush1.msra.mxu0 0.0
          %630 = vmatprep.subr.mxu0 0.0
          %631 = vmatpush1.msra.mxu0 0.0
          %632 = vmatprep.subr.mxu0 0.0
          %633 = vmatpush1.msra.mxu0 0.0
          %634 = vmatprep.subr.mxu0 0.0
          %635 = vmatpush1.msra.mxu0 0.0
          %636 = vmatprep.subr.mxu0 0.0
          %637 = vmatpush1.msra.mxu0 0.0
          %638 = vmatprep.subr.mxu0 0.0
          %639 = vmatpush1.msra.mxu0 0.0
          %640 = vmatprep.subr.mxu0 0.0
          %641 = vmatpush1.msra.mxu0 0.0
          %642 = vmatprep.subr.mxu0 0.0
          %643 = vmatpush1.msra.mxu0 0.0
          %644 = vmatprep.subr.mxu0 0.0
          %645 = vmatpush1.msra.mxu0 0.0
          %646 = vmatprep.subr.mxu0 0.0
          %647 = vmatpush1.msra.mxu0 0.0
          %648 = vmatprep.subr.mxu0 0.0
          %649 = vmatpush1.msra.mxu0 0.0
          %650 = vmatprep.subr.mxu0 0.0
          %651 = vmatpush1.msra.mxu0 0.0
          %652 = vmatprep.subr.mxu0 0.0
          %653 = vmatpush1.msra.mxu0 0.0
          %654 = vmatprep.mubr.f32.mxu0 0.0
          %v655 = vand.u32 %v377, 4294901760
          %v656 = vsub.f32 %v377, %v655
          %657 = vmatmul.mubr.f32.gmra.mrb[0].mxu0 %v656
          %v658 = vpop.f32.mrb[0].mxu0
          %v659 = vadd.f32 %v567, %v658
          %v660 = vpop.f32.mrb[0].mxu0
          %661 = vmatprep.mubr.f32.mxu0 0.0
          %v662 = vand.u32 %v380, 4294901760
          %v663 = vsub.f32 %v380, %v662
          %664 = vmatmul.mubr.f32.gmra.mrb[0].mxu0 %v663
          %v665 = vpop.f32.mrb[0].mxu0
          %v666 = vadd.f32 %v573, %v665
          %v667 = vpop.f32.mrb[0].mxu0
          %668 = vmatprep.mubr.f32.mxu0 0.0
          %v669 = vand.u32 %v383, 4294901760
          %v670 = vsub.f32 %v383, %v669
          %671 = vmatmul.mubr.f32.gmra.mrb[0].mxu0 %v670
          %v672 = vpop.f32.mrb[0].mxu0
          %v673 = vadd.f32 %v579, %v672
          %v674 = vpop.f32.mrb[0].mxu0
          %675 = vmatprep.mubr.f32.mxu0 0.0
          %v676 = vand.u32 %v386, 4294901760
          %v677 = vsub.f32 %v386, %v676
          %678 = vmatmul.mubr.f32.gmra.mrb[0].mxu0 %v677
          %v679 = vpop.f32.mrb[0].mxu0
          %v680 = vadd.f32 %v585, %v679
          %v681 = vpop.f32.mrb[0].mxu0
          %682 = vdwg.mxu0
          %683 = vmatprep.subr.mxu0 0.0
          %v684 = vand.u32 %v374, 4294901760
          %685 = vmatpush1.msra.mxu0 %v684
          %686 = vmatprep.subr.mxu0 0.0
          %687 = vmatpush1.msra.mxu0 0.0
          %688 = vmatprep.subr.mxu0 0.0
          %689 = vmatpush1.msra.mxu0 0.0
          %690 = vmatprep.subr.mxu0 0.0
          %691 = vmatpush1.msra.mxu0 0.0
          %692 = vmatprep.subr.mxu0 0.0
          %693 = vmatpush1.msra.mxu0 0.0
          %694 = vmatprep.subr.mxu0 0.0
          %695 = vmatpush1.msra.mxu0 0.0
          %696 = vmatprep.subr.mxu0 0.0
          %697 = vmatpush1.msra.mxu0 0.0
          %698 = vmatprep.subr.mxu0 0.0
          %699 = vmatpush1.msra.mxu0 0.0
          %700 = vmatprep.subr.mxu0 0.0
          %701 = vmatpush1.msra.mxu0 0.0
          %702 = vmatprep.subr.mxu0 0.0
          %703 = vmatpush1.msra.mxu0 0.0
          %704 = vmatprep.subr.mxu0 0.0
          %705 = vmatpush1.msra.mxu0 0.0
          %706 = vmatprep.subr.mxu0 0.0
          %707 = vmatpush1.msra.mxu0 0.0
          %708 = vmatprep.subr.mxu0 0.0
          %709 = vmatpush1.msra.mxu0 0.0
          %710 = vmatprep.subr.mxu0 0.0
          %711 = vmatpush1.msra.mxu0 0.0
          %712 = vmatprep.subr.mxu0 0.0
          %713 = vmatpush1.msra.mxu0 0.0
          %714 = vmatprep.subr.mxu0 0.0
          %715 = vmatpush1.msra.mxu0 0.0
          %716 = vmatprep.subr.mxu0 0.0
          %717 = vmatpush1.msra.mxu0 0.0
          %718 = vmatprep.subr.mxu0 0.0
          %719 = vmatpush1.msra.mxu0 0.0
          %720 = vmatprep.subr.mxu0 0.0
          %721 = vmatpush1.msra.mxu0 0.0
          %722 = vmatprep.subr.mxu0 0.0
          %723 = vmatpush1.msra.mxu0 0.0
          %724 = vmatprep.subr.mxu0 0.0
          %725 = vmatpush1.msra.mxu0 0.0
          %726 = vmatprep.subr.mxu0 0.0
          %727 = vmatpush1.msra.mxu0 0.0
          %728 = vmatprep.subr.mxu0 0.0
          %729 = vmatpush1.msra.mxu0 0.0
          %730 = vmatprep.subr.mxu0 0.0
          %731 = vmatpush1.msra.mxu0 0.0
          %732 = vmatprep.subr.mxu0 0.0
          %733 = vmatpush1.msra.mxu0 0.0
          %734 = vmatprep.subr.mxu0 0.0
          %735 = vmatpush1.msra.mxu0 0.0
          %736 = vmatprep.subr.mxu0 0.0
          %737 = vmatpush1.msra.mxu0 0.0
          %738 = vmatprep.subr.mxu0 0.0
          %739 = vmatpush1.msra.mxu0 0.0
          %740 = vmatprep.subr.mxu0 0.0
          %741 = vmatpush1.msra.mxu0 0.0
          %742 = vmatprep.subr.mxu0 0.0
          %743 = vmatpush1.msra.mxu0 0.0
          %744 = vmatprep.subr.mxu0 0.0
          %745 = vmatpush1.msra.mxu0 0.0
          %746 = vmatprep.subr.mxu0 0.0
          %747 = vmatpush1.msra.mxu0 0.0
          %748 = vmatprep.mubr.f32.mxu0 0.0
          %v749 = vand.u32 %v377, 4294901760
          %v750 = vsub.f32 %v377, %v749
          %v751 = vand.u32 %v750, 4294901760
          %752 = vmatmul.mubr.f32.gmra.mrb[0].mxu0 %v751
          %v753 = vpop.f32.mrb[0].mxu0
          %v754 = vadd.f32 %v659, %v753
          %v755 = vpop.f32.mrb[0].mxu0
          %756 = vmatprep.mubr.f32.mxu0 0.0
          %v757 = vand.u32 %v380, 4294901760
          %v758 = vsub.f32 %v380, %v757
          %v759 = vand.u32 %v758, 4294901760
          %760 = vmatmul.mubr.f32.gmra.mrb[0].mxu0 %v759
          %v761 = vpop.f32.mrb[0].mxu0
          %v762 = vadd.f32 %v666, %v761
          %v763 = vpop.f32.mrb[0].mxu0
          %764 = vmatprep.mubr.f32.mxu0 0.0
          %v765 = vand.u32 %v383, 4294901760
          %v766 = vsub.f32 %v383, %v765
          %v767 = vand.u32 %v766, 4294901760
          %768 = vmatmul.mubr.f32.gmra.mrb[0].mxu0 %v767
          %v769 = vpop.f32.mrb[0].mxu0
          %v770 = vadd.f32 %v673, %v769
          %v771 = vpop.f32.mrb[0].mxu0
          %772 = vmatprep.mubr.f32.mxu0 0.0
          %v773 = vand.u32 %v386, 4294901760
          %v774 = vsub.f32 %v386, %v773
          %v775 = vand.u32 %v774, 4294901760
          %776 = vmatmul.mubr.f32.gmra.mrb[0].mxu0 %v775
          %v777 = vpop.f32.mrb[0].mxu0
          %v778 = vadd.f32 %v680, %v777
          %v779 = vpop.f32.mrb[0].mxu0
          %780 = vdwg.mxu0
          %781 = vmatprep.subr.mxu0 0.0
          %v782 = vand.u32 %v374, 4294901760
          %v783 = vsub.f32 %v374, %v782
          %v784 = vand.u32 %v783, 4294901760
          %785 = vmatpush1.msra.mxu0 %v784
          %786 = vmatprep.subr.mxu0 0.0
          %787 = vmatpush1.msra.mxu0 0.0
          %788 = vmatprep.subr.mxu0 0.0
          %789 = vmatpush1.msra.mxu0 0.0
          %790 = vmatprep.subr.mxu0 0.0
          %791 = vmatpush1.msra.mxu0 0.0
          %792 = vmatprep.subr.mxu0 0.0
          %793 = vmatpush1.msra.mxu0 0.0
          %794 = vmatprep.subr.mxu0 0.0
          %795 = vmatpush1.msra.mxu0 0.0
          %796 = vmatprep.subr.mxu0 0.0
          %797 = vmatpush1.msra.mxu0 0.0
          %798 = vmatprep.subr.mxu0 0.0
          %799 = vmatpush1.msra.mxu0 0.0
          %800 = vmatprep.subr.mxu0 0.0
          %801 = vmatpush1.msra.mxu0 0.0
          %802 = vmatprep.subr.mxu0 0.0
          %803 = vmatpush1.msra.mxu0 0.0
          %804 = vmatprep.subr.mxu0 0.0
          %805 = vmatpush1.msra.mxu0 0.0
          %806 = vmatprep.subr.mxu0 0.0
          %807 = vmatpush1.msra.mxu0 0.0
          %808 = vmatprep.subr.mxu0 0.0
          %809 = vmatpush1.msra.mxu0 0.0
          %810 = vmatprep.subr.mxu0 0.0
          %811 = vmatpush1.msra.mxu0 0.0
          %812 = vmatprep.subr.mxu0 0.0
          %813 = vmatpush1.msra.mxu0 0.0
          %814 = vmatprep.subr.mxu0 0.0
          %815 = vmatpush1.msra.mxu0 0.0
          %816 = vmatprep.subr.mxu0 0.0
          %817 = vmatpush1.msra.mxu0 0.0
          %818 = vmatprep.subr.mxu0 0.0
          %819 = vmatpush1.msra.mxu0 0.0
          %820 = vmatprep.subr.mxu0 0.0
          %821 = vmatpush1.msra.mxu0 0.0
          %822 = vmatprep.subr.mxu0 0.0
          %823 = vmatpush1.msra.mxu0 0.0
          %824 = vmatprep.subr.mxu0 0.0
          %825 = vmatpush1.msra.mxu0 0.0
          %826 = vmatprep.subr.mxu0 0.0
          %827 = vmatpush1.msra.mxu0 0.0
          %828 = vmatprep.subr.mxu0 0.0
          %829 = vmatpush1.msra.mxu0 0.0
          %830 = vmatprep.subr.mxu0 0.0
          %831 = vmatpush1.msra.mxu0 0.0
          %832 = vmatprep.subr.mxu0 0.0
          %833 = vmatpush1.msra.mxu0 0.0
          %834 = vmatprep.subr.mxu0 0.0
          %835 = vmatpush1.msra.mxu0 0.0
          %836 = vmatprep.subr.mxu0 0.0
          %837 = vmatpush1.msra.mxu0 0.0
          %838 = vmatprep.subr.mxu0 0.0
          %839 = vmatpush1.msra.mxu0 0.0
          %840 = vmatprep.subr.mxu0 0.0
          %841 = vmatpush1.msra.mxu0 0.0
          %842 = vmatprep.subr.mxu0 0.0
          %843 = vmatpush1.msra.mxu0 0.0
          %844 = vmatprep.subr.mxu0 0.0
          %845 = vmatpush1.msra.mxu0 0.0
          %846 = vmatprep.subr.mxu0 0.0
          %847 = vmatpush1.msra.mxu0 0.0
          %848 = vmatprep.mubr.f32.mxu0 0.0
          %v849 = vand.u32 %v377, 4294901760
          %850 = vmatmul.mubr.f32.gmra.mrb[0].mxu0 %v849
          %v851 = vpop.f32.mrb[0].mxu0
          %v852 = vadd.f32 %v754, %v851
          %v853 = vpop.f32.mrb[0].mxu0
          %854 = vmatprep.mubr.f32.mxu0 0.0
          %v855 = vand.u32 %v380, 4294901760
          %856 = vmatmul.mubr.f32.gmra.mrb[0].mxu0 %v855
          %v857 = vpop.f32.mrb[0].mxu0
          %v858 = vadd.f32 %v762, %v857
          %v859 = vpop.f32.mrb[0].mxu0
          %860 = vmatprep.mubr.f32.mxu0 0.0
          %v861 = vand.u32 %v383, 4294901760
          %862 = vmatmul.mubr.f32.gmra.mrb[0].mxu0 %v861
          %v863 = vpop.f32.mrb[0].mxu0
          %v864 = vadd.f32 %v770, %v863
          %v865 = vpop.f32.mrb[0].mxu0
          %866 = vmatprep.mubr.f32.mxu0 0.0
          %v867 = vand.u32 %v386, 4294901760
          %868 = vmatmul.mubr.f32.gmra.mrb[0].mxu0 %v867
          %v869 = vpop.f32.mrb[0].mxu0
          %v870 = vadd.f32 %v778, %v869
          %v871 = vpop.f32.mrb[0].mxu0
          %872 = vdwg.mxu0
          %873 = vmatprep.subr.mxu0 0.0
          %v874 = vand.u32 %v374, 4294901760
          %875 = vmatpush1.msra.mxu0 %v874
          %876 = vmatprep.subr.mxu0 0.0
          %877 = vmatpush1.msra.mxu0 0.0
          %878 = vmatprep.subr.mxu0 0.0
          %879 = vmatpush1.msra.mxu0 0.0
          %880 = vmatprep.subr.mxu0 0.0
          %881 = vmatpush1.msra.mxu0 0.0
          %882 = vmatprep.subr.mxu0 0.0
          %883 = vmatpush1.msra.mxu0 0.0
          %884 = vmatprep.subr.mxu0 0.0
          %885 = vmatpush1.msra.mxu0 0.0
          %886 = vmatprep.subr.mxu0 0.0
          %887 = vmatpush1.msra.mxu0 0.0
          %888 = vmatprep.subr.mxu0 0.0
          %889 = vmatpush1.msra.mxu0 0.0
          %890 = vmatprep.subr.mxu0 0.0
          %891 = vmatpush1.msra.mxu0 0.0
          %892 = vmatprep.subr.mxu0 0.0
          %893 = vmatpush1.msra.mxu0 0.0
          %894 = vmatprep.subr.mxu0 0.0
          %895 = vmatpush1.msra.mxu0 0.0
          %896 = vmatprep.subr.mxu0 0.0
          %897 = vmatpush1.msra.mxu0 0.0
          %898 = vmatprep.subr.mxu0 0.0
          %899 = vmatpush1.msra.mxu0 0.0
          %900 = vmatprep.subr.mxu0 0.0
          %901 = vmatpush1.msra.mxu0 0.0
          %902 = vmatprep.subr.mxu0 0.0
          %903 = vmatpush1.msra.mxu0 0.0
          %904 = vmatprep.subr.mxu0 0.0
          %905 = vmatpush1.msra.mxu0 0.0
          %906 = vmatprep.subr.mxu0 0.0
          %907 = vmatpush1.msra.mxu0 0.0
          %908 = vmatprep.subr.mxu0 0.0
          %909 = vmatpush1.msra.mxu0 0.0
          %910 = vmatprep.subr.mxu0 0.0
          %911 = vmatpush1.msra.mxu0 0.0
          %912 = vmatprep.subr.mxu0 0.0
          %913 = vmatpush1.msra.mxu0 0.0
          %914 = vmatprep.subr.mxu0 0.0
          %915 = vmatpush1.msra.mxu0 0.0
          %916 = vmatprep.subr.mxu0 0.0
          %917 = vmatpush1.msra.mxu0 0.0
          %918 = vmatprep.subr.mxu0 0.0
          %919 = vmatpush1.msra.mxu0 0.0
          %920 = vmatprep.subr.mxu0 0.0
          %921 = vmatpush1.msra.mxu0 0.0
          %922 = vmatprep.subr.mxu0 0.0
          %923 = vmatpush1.msra.mxu0 0.0
          %924 = vmatprep.subr.mxu0 0.0
          %925 = vmatpush1.msra.mxu0 0.0
          %926 = vmatprep.subr.mxu0 0.0
          %927 = vmatpush1.msra.mxu0 0.0
          %928 = vmatprep.subr.mxu0 0.0
          %929 = vmatpush1.msra.mxu0 0.0
          %930 = vmatprep.subr.mxu0 0.0
          %931 = vmatpush1.msra.mxu0 0.0
          %932 = vmatprep.subr.mxu0 0.0
          %933 = vmatpush1.msra.mxu0 0.0
          %934 = vmatprep.subr.mxu0 0.0
          %935 = vmatpush1.msra.mxu0 0.0
          %936 = vmatprep.subr.mxu0 0.0
          %937 = vmatpush1.msra.mxu0 0.0
          %938 = vmatprep.mubr.f32.mxu0 0.0
          %v939 = vand.u32 %v377, 4294901760
          %940 = vmatmul.mubr.f32.gmra.mrb[0].mxu0 %v939
          %v941 = vpop.f32.mrb[0].mxu0
          %v942 = vadd.f32 %v852, %v941
          %v943 = vpop.f32.mrb[0].mxu0
          %944 = vmatprep.mubr.f32.mxu0 0.0
          %v945 = vand.u32 %v380, 4294901760
          %946 = vmatmul.mubr.f32.gmra.mrb[0].mxu0 %v945
          %v947 = vpop.f32.mrb[0].mxu0
          %v948 = vadd.f32 %v858, %v947
          %v949 = vpop.f32.mrb[0].mxu0
          %950 = vmatprep.mubr.f32.mxu0 0.0
          %v951 = vand.u32 %v383, 4294901760
          %952 = vmatmul.mubr.f32.gmra.mrb[0].mxu0 %v951
          %v953 = vpop.f32.mrb[0].mxu0
          %v954 = vadd.f32 %v864, %v953
          %v955 = vpop.f32.mrb[0].mxu0
          %956 = vmatprep.mubr.f32.mxu0 0.0
          %v957 = vand.u32 %v386, 4294901760
          %958 = vmatmul.mubr.f32.gmra.mrb[0].mxu0 %v957
          %v959 = vpop.f32.mrb[0].mxu0
          %v960 = vadd.f32 %v870, %v959
          %v961 = vpop.f32.mrb[0].mxu0
          %962 = vdwg.mxu0
          %v963 = vadd.f32 %v370, %v942
          %v964 = vadd.f32 %v371, %v948
          %v965 = vadd.f32 %v372, %v954
          %v966 = vadd.f32 %v373, %v960
          %967 = vst [vmem:[#allocation2] sm:$0xff] %v963
          %968 = vst [vmem:[#allocation2 + $0x8] sm:$0xff] %v964
          %969 = vst [vmem:[#allocation2 + $0x10] sm:$0xff] %v965
          %970 = vst [vmem:[#allocation2 + $0x18] sm:$0xff] %v966
        $region44: #{tpu_custom_call.1} parent=27 // pred_fallthru
          _
        // Predicated region
        $region45: #{tpu_custom_call.1} parent=27 // pred_check
          %p971 = pneg %p322
        $region46: #{tpu_custom_call.1} parent=27 // pred_check_branch
          %973 = sbr.rel (%p971) target = $region48
        $region47: #{tpu_custom_call.1} parent=27 // pred_region
          %v974 = vld [vmem:[#allocation2] sm:$0xff]
          %v975 = vld [vmem:[#allocation2 + $0x8] sm:$0xff]
          %v976 = vld [vmem:[#allocation2 + $0x10] sm:$0xff]
          %v977 = vld [vmem:[#allocation2 + $0x18] sm:$0xff]
          %978 = vst [vmem:[%s293] sm:$0xff] %v974
          %979 = vst [vmem:[%s293 + $0x8] sm:$0xff] %v975
          %980 = vst [vmem:[%s293 + $0x10] sm:$0xff] %v976
          %981 = vst [vmem:[%s293 + $0x18] sm:$0xff] %v977
        $region48: #{tpu_custom_call.1} parent=27 // pred_fallthru
          _
        %s982 = sand.u32 %s156, 1
        %s983 = scalar_lea.sflag [#allocation7], %s982
        %s984 = sand.u32 %s156, 1
        %s985 = smul.addr %s984, 32
        %s986 = scalar_lea.vmem [#allocation10], %s985
        // Predicated region
        $region49: #{tpu_custom_call.1} parent=27 // pred_check
          %p987 = pneg %p166
        $region50: #{tpu_custom_call.1} parent=27 // pred_check_branch
          %989 = sbr.rel (%p987) target = $region52
        $region51: #{tpu_custom_call.1} parent=27 // pred_region
          %s990 = smul.u32 4, %s33
          %s992 = ssub.s32 512, 512
          %993 = vsyncadd %s983, %s992
          %s994 = smul.addr %s32, 4
          %s995 = sadd.s32 %s990, %s994
          %s996 = smul.addr %s995, 128
          %s997 = scalar_lea.hbm %s3, %s996
          %s998 = sshll.u32 %s986, 4
          %s999 = int_to_ptr.vmem [resolvable:$true] %s998
          %1004 = dma.vmem_to_hbm [thread:$0]  %s999, 512, %s997, %s983, 128, 128, 8
        $region52: #{tpu_custom_call.1} parent=27 // pred_fallthru
          _
      $region28: #{tpu_custom_call.1} parent=5 // pred_fallthru
        _
      %p1005 = scmp.le.s32.totalorder 2, %s22
      // Predicated region
      $region53: #{tpu_custom_call.1} parent=5 // pred_check
        %p1006 = pneg %p1005
      $region54: #{tpu_custom_call.1} parent=5 // pred_check_branch
        %1008 = sbr.rel (%p1006) target = $region56
      $region55: #{tpu_custom_call.1} parent=5 // pred_region
        %s1009 = ssub.s32 %s22, 2
        // Predicated region
        $region57: #{tpu_custom_call.1} parent=55 // pred_check
          %p1010 = pneg %p172
        $region58: #{tpu_custom_call.1} parent=55 // pred_check_branch
          %1012 = sbr.rel (%p1010) target = $region60
        $region59: #{tpu_custom_call.1} parent=55 // pred_region
          %s1013 = sand.u32 %s157, 1
          %s1014 = scalar_lea.sflag [#allocation7], %s1013
          %s1015 = sand.u32 %s157, 1
          %s1016 = smul.addr %s1015, 32
          %s1017 = scalar_lea.vmem [#allocation10], %s1016
          %1018 = dma.done %s1014, 512
        $region60: #{tpu_custom_call.1} parent=55 // pred_fallthru
          _
      $region56: #{tpu_custom_call.1} parent=5 // pred_fallthru
        _
    $region6: #{tpu_custom_call.1} parent=1 // loop_footer
      %s26 = sadd.s32 1, %s22
    $region7: #{tpu_custom_call.1} parent=1 // loop_footer_branch
      %21 = sbr.rel target = $region3
    $region8: #{tpu_custom_call.1} parent=1 // loop_exit
      _
    %1019 = vsyncpa [#allocation6], 1
    %s1020 = scalar_lea.sflag [#allocation6], 1
    %1021 = vsyncpa %s1020, 1
    %1022 = vsyncpa [#allocation9], 1
    %s1023 = scalar_lea.sflag [#allocation9], 1
    %1024 = vsyncpa %s1023, 1
    %1025 = vsyncpa [#allocation7], 1
    %s1026 = scalar_lea.sflag [#allocation7], 1
    %1027 = vsyncpa %s1026, 1

</llo_original>
